<compile_context>
chip_gen: v7x
topology: tpu7x:2x2x1
jax: 0.10.0
libtpu: 0.0.40
codegen_flags: <defaults>
</compile_context>

<pallas_src>
import jax
import jax.numpy as jnp
from jax.experimental import pallas as pl
from jax.experimental.pallas import tpu as pltpu


def _round_up(n, m):
    return (n + m - 1) // m * m


# ---------------------------------------------------------------------------
# Kernels
# ---------------------------------------------------------------------------
def _gru_cell_kernel(x_ref, h_ref, wi_ref, wh_ref, b_ref, out_ref):
    """Batched GRU-cell step on one (tm, Hp) row tile (hidden state provided)."""
    hp = out_ref.shape[-1]

    x = x_ref[...]                       # (tm, Ep)  bf16
    h = h_ref[...]                       # (tm, Hp)  bf16

    # Two fused MXU matmuls with f32 accumulation:
    #   (tm, Ep) @ (Ep, 3*Hp)  and  (tm, Hp) @ (Hp, 3*Hp)
    gi = jnp.dot(x, wi_ref[...], preferred_element_type=jnp.float32)
    gh = jnp.dot(h, wh_ref[...], preferred_element_type=jnp.float32)

    b = b_ref[...]                       # (4, Hp) f32: [b_r, b_z, b_in, b_hn]
    r = jax.nn.sigmoid(gi[:, 0 * hp:1 * hp] + gh[:, 0 * hp:1 * hp] + b[0:1])
    z = jax.nn.sigmoid(gi[:, 1 * hp:2 * hp] + gh[:, 1 * hp:2 * hp] + b[1:2])
    n = jnp.tanh(gi[:, 2 * hp:3 * hp] + b[2:3]
                 + r * (gh[:, 2 * hp:3 * hp] + b[3:4]))

    hf = h.astype(jnp.float32)
    out_ref[...] = (n + z * (hf - n)).astype(out_ref.dtype)   # == (1-z)*n + z*h


def _gru_cell_kernel_h0(x_ref, wi_ref, b_ref, out_ref):
    """hid=None fast path: h == 0, so the h-side matmul and h DMA vanish."""
    hp = out_ref.shape[-1]

    x = x_ref[...]                       # (tm, Ep) bf16
    gi = jnp.dot(x, wi_ref[...], preferred_element_type=jnp.float32)

    b = b_ref[...]                       # (4, Hp) f32
    r = jax.nn.sigmoid(gi[:, 0 * hp:1 * hp] + b[0:1])
    z = jax.nn.sigmoid(gi[:, 1 * hp:2 * hp] + b[1:2])
    n = jnp.tanh(gi[:, 2 * hp:3 * hp] + b[2:3] + r * b[3:4])

    out_ref[...] = (n - z * n).astype(out_ref.dtype)          # (1-z)*n, h == 0


# ---------------------------------------------------------------------------
# pallas_call wrapper
# ---------------------------------------------------------------------------
def gru_cell_pallas(x, h, w_i, w_h, bias, *, tm=512, out_dtype=jnp.float32):
    """Batched single-step GRU cell.

    x      : (N, Ep)     bf16, Ep multiple of 128
    h      : (N, Hp)     bf16 or None (treated as zeros)
    w_i    : (Ep, 3*Hp)  bf16  (gates r, z, n stacked along lanes)
    w_h    : (Hp, 3*Hp)  bf16
    bias   : (4, Hp)     f32   rows = [b_ir+b_hr, b_iz+b_hz, b_in, b_hn]
    returns: (N, Hp)     out_dtype
    """
    N, Ep = x.shape
    Hp = bias.shape[1]

    # Row tile: as large as possible (fills the MXU M dimension, amortizes the
    # ~0.35us/step pipeline overhead) but never larger than needed for small N.
    # Always a multiple of 8.  When N > tm the grid has >= 2 "parallel" steps,
    # so both v7x TensorCores get work.
    tm_eff = max(8, min(tm, _round_up(N, 8)))
    Np = _round_up(N, tm_eff)
    pad = Np - N
    if pad:
        x = jnp.pad(x, ((0, pad), (0, 0)))
        if h is not None:
            h = jnp.pad(h, ((0, pad), (0, 0)))

    grid = (Np // tm_eff,)

    row_x = pl.BlockSpec((tm_eff, Ep), lambda i: (i, 0))
    row_h = pl.BlockSpec((tm_eff, Hp), lambda i: (i, 0))
    row_o = pl.BlockSpec((tm_eff, Hp), lambda i: (i, 0))
    # Whole-array VMEM residency for weights/biases: no pipelining, hence no
    # double-buffering of the (largest) operands.
    vmem_whole = pl.BlockSpec(memory_space=pltpu.MemorySpace.VMEM)

    compiler_params = pltpu.CompilerParams(
        dimension_semantics=("parallel",),
        vmem_limit_bytes=64 * 1024 * 1024,  # bf16 weights single-buffered fit v7x
    )

    if h is None:
        out = pl.pallas_call(
            _gru_cell_kernel_h0,
            out_shape=jax.ShapeDtypeStruct((Np, Hp), out_dtype),
            grid_spec=pltpu.PrefetchScalarGridSpec(
                num_scalar_prefetch=0,
                grid=grid,
                in_specs=[row_x, vmem_whole, vmem_whole],
                out_specs=row_o,
            ),
            compiler_params=compiler_params,
        )(x, w_i, bias)
    else:
        out = pl.pallas_call(
            _gru_cell_kernel,
            out_shape=jax.ShapeDtypeStruct((Np, Hp), out_dtype),
            grid_spec=pltpu.PrefetchScalarGridSpec(
                num_scalar_prefetch=0,
                grid=grid,
                in_specs=[row_x, row_h, vmem_whole, vmem_whole, vmem_whole],
                out_specs=row_o,
            ),
            compiler_params=compiler_params,
        )(x, h, w_i, w_h, bias)

    return out[:N] if pad else out


# ---------------------------------------------------------------------------
# Module wrapper (GRU-variant ReformerRNN)
# ---------------------------------------------------------------------------
class ReformerRNNPallas:
    """GRU-variant ReformerRNN forward, matching the PyTorch reshape semantics."""
    # TODO(synk): 'rnn' and 'lstm' RNN_OPTS variants are not implemented here.

    def __init__(self, embedding_size, key):
        E = H = embedding_size
        self.emb_size = E
        self.hid_size = H
        self.Ep = _round_up(E, 128)    # lane-dense padding
        self.Hp = _round_up(H, 128)

        bound = 1.0 / (H ** 0.5)
        ks = jax.random.split(key, 4)
        # PyTorch nn.GRU layout: weight_ih (3H, E), weight_hh (3H, H),
        # biases (3H,), gate order r, z, n.  Init U(-1/sqrt(H), 1/sqrt(H)).
        w_ih = jax.random.uniform(ks[0], (3 * H, E), jnp.float32, -bound, bound)
        w_hh = jax.random.uniform(ks[1], (3 * H, H), jnp.float32, -bound, bound)
        b_ih = jax.random.uniform(ks[2], (3 * H,), jnp.float32, -bound, bound)
        b_hh = jax.random.uniform(ks[3], (3 * H,), jnp.float32, -bound, bound)
        self._raw = (w_ih, w_hh, b_ih, b_hh)   # for the pure-JAX reference

        def pad2(a, rows, cols):
            r, c = a.shape
            return jnp.pad(a, ((0, rows - r), (0, cols - c)))

        # Per-gate transposed weights, zero-padded to (Ep, Hp) / (Hp, Hp),
        # fused along the lane axis -> (Ep, 3*Hp) and (Hp, 3*Hp), cast bf16.
        wi_gates = [w_ih[g * H:(g + 1) * H, :].T for g in range(3)]  # (E, H)
        wh_gates = [w_hh[g * H:(g + 1) * H, :].T for g in range(3)]  # (H, H)
        self.w_i = jnp.concatenate(
            [pad2(w, self.Ep, self.Hp) for w in wi_gates], axis=1
        ).astype(jnp.bfloat16)
        self.w_h = jnp.concatenate(
            [pad2(w, self.Hp, self.Hp) for w in wh_gates], axis=1
        ).astype(jnp.bfloat16)

        # Biases (f32): r/z gates combine b_i + b_h; n gate keeps them separate
        # because b_hn sits inside r * (...).
        b_stack = jnp.stack([
            b_ih[0:H] + b_hh[0:H],
            b_ih[H:2 * H] + b_hh[H:2 * H],
            b_ih[2 * H:3 * H],
            b_hh[2 * H:3 * H],
        ], axis=0)                                            # (4, H)
        self.bias = jnp.pad(b_stack, ((0, 0), (0, self.Hp - H)))  # (4, Hp) f32

    def __call__(self, x, hid=None):
        B, T, E = x.shape
        assert E == self.emb_size
        N = B * T

        x_flat = x.reshape(N, E)
        x_p = jnp.pad(x_flat, ((0, 0), (0, self.Ep - E))).astype(jnp.bfloat16)

        if hid is None:
            h_p = None
            hid_shape = (B, T, self.hid_size)
        else:
            h_flat = hid.reshape(N, self.hid_size)
            h_p = jnp.pad(
                h_flat, ((0, 0), (0, self.Hp - self.hid_size))
            ).astype(jnp.bfloat16)
            hid_shape = hid.shape

        h_new_p = gru_cell_pallas(x_p, h_p, self.w_i, self.w_h, self.bias,
                                  out_dtype=x.dtype)
        h_new = h_new_p[:, :self.hid_size]

        out = h_new.reshape(x.shape)          # out.view(x.size())
        hid_new = h_new.reshape(hid_shape)    # hidden.view(hid.size())
        return out, hid_new

    def reference(self, x, hid=None, *, match_kernel_precision=True):
        """Pure-JAX GRU-cell reference (PyTorch gate equations).

        match_kernel_precision=True quantizes the matmul operands to bf16 the
        same way the kernel does (gate math stays f32)."""
        B, T, E = x.shape
        H = self.hid_size
        if hid is None:
            hid = jnp.zeros((B, T, H), dtype=x.dtype)
        w_ih, w_hh, b_ih, b_hh = self._raw
        xf = x.reshape(-1, E).astype(jnp.float32)
        hf = hid.reshape(-1, H).astype(jnp.float32)
        if match_kernel_precision:
            q = lambda a: a.astype(jnp.bfloat16).astype(jnp.float32)
            xq, hq, wiq, whq = q(xf), q(hf), q(w_ih), q(w_hh)
        else:
            xq, hq, wiq, whq = xf, hf, w_ih, w_hh
        gi = xq @ wiq.T + b_ih
        gh = hq @ whq.T + b_hh
        i_r, i_z, i_n = gi[:, :H], gi[:, H:2 * H], gi[:, 2 * H:]
        h_r, h_z, h_n = gh[:, :H], gh[:, H:2 * H], gh[:, 2 * H:]
        r = jax.nn.sigmoid(i_r + h_r)
        z = jax.nn.sigmoid(i_z + h_z)
        n = jnp.tanh(i_n + r * h_n)
        h_new = (1.0 - z) * n + z * hq
        return h_new.reshape(x.shape).astype(x.dtype), \
               h_new.reshape(hid.shape).astype(x.dtype)


if __name__ == "__main__":
    key = jax.random.PRNGKey(0)
    k_param, k_x, k_h = jax.random.split(key, 3)

    B, T, E = 2, 8, 32          # batch=2, seq=8, embedding/hidden=32
    model = ReformerRNNPallas(E, k_param)
    x = jax.random.normal(k_x, (B, T, E), dtype=jnp.float32)
    h0 = 0.5 * jax.random.normal(k_h, (B, T, E), dtype=jnp.float32)

    # --- hid=None fast path ------------------------------------------------
    out0, hid0 = model(x, hid=None)
    out0 = jax.block_until_ready(out0)
    hid0 = jax.block_until_ready(hid0)
    assert out0.shape == x.shape and hid0.shape == (B, T, E)

    ref_out0, ref_hid0 = model.reference(x, None, match_kernel_precision=True)
    assert jnp.allclose(out0, ref_out0, atol=1e-3, rtol=1e-3)
    assert jnp.allclose(hid0, ref_hid0, atol=1e-3, rtol=1e-3)

    # --- hid provided path -------------------------------------------------
    out1, hid1 = model(x, hid=h0)
    out1 = jax.block_until_ready(out1)
    hid1 = jax.block_until_ready(hid1)
    assert out1.shape == x.shape and hid1.shape == h0.shape

    ref_out1, ref_hid1 = model.reference(x, h0, match_kernel_precision=True)
    assert jnp.allclose(out1, ref_out1, atol=1e-3, rtol=1e-3)
    assert jnp.allclose(hid1, ref_hid1, atol=1e-3, rtol=1e-3)

    # Loose sanity check against the full-f32 PyTorch-equivalent math
    # (difference is only bf16 operand quantization).
    f32_out1, _ = model.reference(x, h0, match_kernel_precision=False)
    assert jnp.allclose(out1, f32_out1, atol=5e-2, rtol=5e-2)

    print("KERNEL_OK")
</pallas_src>

<mosaic_0001>
module attributes {stable_mosaic.version = 11 : i64} {
  func.func @_gru_cell_kernel_h0(%arg0: i32, %arg1: memref<16x128xbf16, #tpu.memory_space<vmem>>, %arg2: memref<128x384xbf16, #tpu.memory_space<vmem>>, %arg3: memref<4x128xf32, #tpu.memory_space<vmem>>, %arg4: memref<16x128xf32, #tpu.memory_space<vmem>>) attributes {dimension_semantics = [#tpu.dimension_semantics<parallel>], iteration_bounds = array<i64: 1>, scalar_prefetch = 0 : i64, scratch_operands = 0 : i64, tpu.core_type = #tpu.core_type<tc>, window_params = [{transform_indices = @transform_0, window_bounds = array<i64: 16, 128>}, {pipeline_mode = #tpu.pipeline_mode<synchronous>, transform_indices = @transform_1, window_bounds = array<i64: 128, 384>}, {pipeline_mode = #tpu.pipeline_mode<synchronous>, transform_indices = @transform_2, window_bounds = array<i64: 4, 128>}, {transform_indices = @transform_3, window_bounds = array<i64: 16, 128>}]} {
    %c0 = arith.constant 0 : index
    %c0_0 = arith.constant 0 : index
    %0 = vector.load %arg1[%c0, %c0_0] : memref<16x128xbf16, #tpu.memory_space<vmem>>, vector<16x128xbf16>
    %c0_1 = arith.constant 0 : index
    %c0_2 = arith.constant 0 : index
    %1 = vector.load %arg2[%c0_1, %c0_2] : memref<128x384xbf16, #tpu.memory_space<vmem>>, vector<128x384xbf16>
    %cst = arith.constant dense<0.000000e+00> : vector<16x384xf32>
    %2 = tpu.matmul %0, %1, %cst {dimension_numbers = #tpu.dot_dimension_numbers<[1], [0], [0], [1], [0, 0, 1, 1], [], []>} : vector<16x128xbf16>, vector<128x384xbf16>, vector<16x384xf32> -> vector<16x384xf32>
    %c0_3 = arith.constant 0 : index
    %c0_4 = arith.constant 0 : index
    %3 = vector.load %arg3[%c0_3, %c0_4] : memref<4x128xf32, #tpu.memory_space<vmem>>, vector<4x128xf32>
    %4 = vector.extract_strided_slice %2 {offsets = [0, 0], sizes = [16, 128], strides = [1, 1]} : vector<16x384xf32> to vector<16x128xf32>
    %5 = vector.extract_strided_slice %3 {offsets = [0, 0], sizes = [1, 128], strides = [1, 1]} : vector<4x128xf32> to vector<1x128xf32>
    %6 = vector.broadcast %5 : vector<1x128xf32> to vector<16x128xf32>
    %7 = arith.addf %4, %6 : vector<16x128xf32>
    %8 = arith.negf %7 : vector<16x128xf32>
    %9 = math.exp %8 : vector<16x128xf32>
    %cst_5 = arith.constant 1.000000e+00 : f32
    %10 = vector.broadcast %cst_5 : f32 to vector<16x128xf32>
    %11 = arith.addf %10, %9 : vector<16x128xf32>
    %12 = arith.divf %10, %11 : vector<16x128xf32>
    %13 = vector.extract_strided_slice %2 {offsets = [0, 128], sizes = [16, 128], strides = [1, 1]} : vector<16x384xf32> to vector<16x128xf32>
    %14 = vector.extract_strided_slice %3 {offsets = [1, 0], sizes = [1, 128], strides = [1, 1]} : vector<4x128xf32> to vector<1x128xf32>
    %15 = vector.broadcast %14 : vector<1x128xf32> to vector<16x128xf32>
    %16 = arith.addf %13, %15 : vector<16x128xf32>
    %17 = arith.negf %16 : vector<16x128xf32>
    %18 = math.exp %17 : vector<16x128xf32>
    %cst_6 = arith.constant 1.000000e+00 : f32
    %19 = vector.broadcast %cst_6 : f32 to vector<16x128xf32>
    %20 = arith.addf %19, %18 : vector<16x128xf32>
    %21 = arith.divf %19, %20 : vector<16x128xf32>
    %22 = vector.extract_strided_slice %2 {offsets = [0, 256], sizes = [16, 128], strides = [1, 1]} : vector<16x384xf32> to vector<16x128xf32>
    %23 = vector.extract_strided_slice %3 {offsets = [2, 0], sizes = [1, 128], strides = [1, 1]} : vector<4x128xf32> to vector<1x128xf32>
    %24 = vector.broadcast %23 : vector<1x128xf32> to vector<16x128xf32>
    %25 = arith.addf %22, %24 : vector<16x128xf32>
    %26 = vector.extract_strided_slice %3 {offsets = [3, 0], sizes = [1, 128], strides = [1, 1]} : vector<4x128xf32> to vector<1x128xf32>
    %27 = vector.broadcast %26 : vector<1x128xf32> to vector<16x128xf32>
    %28 = arith.mulf %12, %27 : vector<16x128xf32>
    %29 = arith.addf %25, %28 : vector<16x128xf32>
    %30 = math.tanh %29 : vector<16x128xf32>
    %31 = arith.mulf %21, %30 : vector<16x128xf32>
    %32 = arith.subf %30, %31 : vector<16x128xf32>
    %c0_7 = arith.constant 0 : index
    %c0_8 = arith.constant 0 : index
    %33 = vector.load %arg4[%c0_7, %c0_8] : memref<16x128xf32, #tpu.memory_space<vmem>>, vector<16x128xf32>
    tpu.vector_store %arg4[%c0_7, %c0_8], %32 {strides = array<i32>} : memref<16x128xf32, #tpu.memory_space<vmem>>, vector<16x128xf32>,
    return
  }
  func.func @transform_0(%arg0: i32) -> (i32, i32) {
    %c0_i32 = arith.constant 0 : i32
    %c0_i32_0 = arith.constant 0 : i32
    return %arg0, %c0_i32 : i32, i32
  }
  func.func @transform_1(%arg0: i32) -> (i32, i32) {
    %c0_i32 = arith.constant 0 : i32
    %c0_i32_0 = arith.constant 0 : i32
    %c0_i32_1 = arith.constant 0 : i32
    return %c0_i32, %c0_i32_0 : i32, i32
  }
  func.func @transform_2(%arg0: i32) -> (i32, i32) {
    %c0_i32 = arith.constant 0 : i32
    %c0_i32_0 = arith.constant 0 : i32
    %c0_i32_1 = arith.constant 0 : i32
    return %c0_i32, %c0_i32_0 : i32, i32
  }
  func.func @transform_3(%arg0: i32) -> (i32, i32) {
    %c0_i32 = arith.constant 0 : i32
    %c0_i32_0 = arith.constant 0 : i32
    return %arg0, %c0_i32 : i32, i32
  }
}

</mosaic_0001>

<llo_original>
// kernel: tpu_custom_call.1
$region0: #{tpu_custom_call.1}
  #allocation0 [shape = 'u32[]', space=smem, size = 0x4, offset = 0x4, fixed_abs, tag = 'smem constant byte address 0x4 - core index']
  #allocation1 [shape = 'u32[144,128]{1,0:T(1,128)}', space=vmem, size = 0x12000, scoped, tag = 'internal scratch']
  %s0 = inlined_call_operand.hbm [shape: bf16[16,128], index: 0, kind: input, shape index: {}]
  %s1 = inlined_call_operand.hbm [shape: bf16[128,384], index: 1, kind: input, shape index: {}]
  %s2 = inlined_call_operand.hbm [shape: f32[4,128], index: 2, kind: input, shape index: {}]
  %s3 = inlined_call_operand.hbm [shape: f32[16,128], index: 3, kind: output, shape index: {}]
  %s4 = sld [smem:[#allocation0]]
  $region34: #{tpu_custom_call.1} parent=0
    _
  %s6 = ssub.s32 1, %s4
  %s7 = scalar_select 0, %s6, %s4
  $region1: #{tpu_custom_call.1} parent=0
    #allocation2 [shape = 'u8[4096]{0}', space=vmem, size = 0x1000, scoped, tag = 'input window, operand 0, single buffered']
    #allocation3 [shape = 's32[1]{0}', space=sflag, size = 0x4, scoped, tag = 'scoped memory for tpu_custom_call.1']
    #allocation4 [shape = 's32[1]{0}', space=sflag, size = 0x4, scoped, tag = 'scoped memory for tpu_custom_call.1']
    #allocation5 [shape = 'u8[98304]{0}', space=vmem, size = 0x18000, scoped, tag = 'input window, operand 1, single buffered']
    #allocation6 [shape = 's32[1]{0}', space=sflag, size = 0x4, scoped, tag = 'scoped memory for tpu_custom_call.1']
    #allocation7 [shape = 'u8[2048]{0}', space=vmem, size = 0x800, scoped, tag = 'input window, operand 2, single buffered']
    #allocation8 [shape = 'u8[8192]{0}', space=vmem, size = 0x2000, scoped, tag = 'output window, operand 0, single buffered']
    %8 = vsyncpa [#allocation3], 0
    %9 = vsyncpa [#allocation6], 0
    %10 = vsyncpa [#allocation4], 0
    // Predicated region
    $region2: #{tpu_custom_call.1} parent=1 // pred_check
      _
    $region3: #{tpu_custom_call.1} parent=1 // pred_check_branch
      %12 = sbr.rel (0) target = $region5
    $region4: #{tpu_custom_call.1} parent=1 // pred_region
      %s14 = ssub.s32 128, 128
      %15 = vsyncadd [#allocation3], %s14
      %s16 = sshll.u32 [#allocation2], 4
      %s17 = int_to_ptr.vmem [resolvable:$true] %s16
      %22 = dma.hbm_to_vmem [thread:$0]  %s0, 128, %s17, [#allocation3], 64, 64, 4
    $region5: #{tpu_custom_call.1} parent=1 // pred_fallthru
      _
    // Predicated region
    $region6: #{tpu_custom_call.1} parent=1 // pred_check
      _
    $region7: #{tpu_custom_call.1} parent=1 // pred_check_branch
      %24 = sbr.rel (0) target = $region9
    $region8: #{tpu_custom_call.1} parent=1 // pred_region
      %s26 = ssub.s32 3072, 3072
      %27 = vsyncadd [#allocation6], %s26
      %s28 = sshll.u32 [#allocation5], 4
      %s29 = int_to_ptr.vmem [resolvable:$true] %s28
      %34 = dma.hbm_to_vmem [thread:$0]  %s1, 3072, %s29, [#allocation6], 192, 192, 12
    $region9: #{tpu_custom_call.1} parent=1 // pred_fallthru
      _
    // Predicated region
    $region10: #{tpu_custom_call.1} parent=1 // pred_check
      _
    $region11: #{tpu_custom_call.1} parent=1 // pred_check_branch
      %36 = sbr.rel (0) target = $region13
    $region12: #{tpu_custom_call.1} parent=1 // pred_region
      %s38 = ssub.s32 64, 64
      %39 = vsyncadd [#allocation6], %s38
      %s41 = sshll.u32 [#allocation7], 4
      %s42 = int_to_ptr.vmem [resolvable:$true] %s41
      %44 = dma.hbm_to_vmem [thread:$0]  %s2, 64, %s42, [#allocation6]
    $region13: #{tpu_custom_call.1} parent=1 // pred_fallthru
      _
    // Predicated region
    $region14: #{tpu_custom_call.1} parent=1 // pred_check
      _
    $region15: #{tpu_custom_call.1} parent=1 // pred_check_branch
      %46 = sbr.rel (0) target = $region17
    $region16: #{tpu_custom_call.1} parent=1 // pred_region
      %47 = dma.done [#allocation3], 128
    $region17: #{tpu_custom_call.1} parent=1 // pred_fallthru
      _
    // Predicated region
    $region18: #{tpu_custom_call.1} parent=1 // pred_check
      _
    $region19: #{tpu_custom_call.1} parent=1 // pred_check_branch
      %49 = sbr.rel (0) target = $region21
    $region20: #{tpu_custom_call.1} parent=1 // pred_region
      %50 = dma.done [#allocation6], 3072
    $region21: #{tpu_custom_call.1} parent=1 // pred_fallthru
      _
    // Predicated region
    $region22: #{tpu_custom_call.1} parent=1 // pred_check
      _
    $region23: #{tpu_custom_call.1} parent=1 // pred_check_branch
      %52 = sbr.rel (0) target = $region25
    $region24: #{tpu_custom_call.1} parent=1 // pred_region
      %53 = dma.done [#allocation6], 64
    $region25: #{tpu_custom_call.1} parent=1 // pred_fallthru
      _
    %v55 = vld [vmem:[#allocation2] sm:$0xf]
    %v56 = vld [vmem:[#allocation2 + $0x4] sm:$0xf]
    %v57 = vld [vmem:[#allocation5] sm:$0xff]
    %v58 = vld [vmem:[#allocation5 + $0x8] sm:$0xf]
    %v59 = vld [vmem:[#allocation5 + $0xc] sm:$0xff]
    %v60 = vld [vmem:[#allocation5 + $0x14] sm:$0xf]
    %v61 = vld [vmem:[#allocation5 + $0x18] sm:$0xff]
    %v62 = vld [vmem:[#allocation5 + $0x20] sm:$0xf]
    %v63 = vld [vmem:[#allocation5 + $0x24] sm:$0xff]
    %v64 = vld [vmem:[#allocation5 + $0x2c] sm:$0xf]
    %v65 = vld [vmem:[#allocation5 + $0x30] sm:$0xff]
    %v66 = vld [vmem:[#allocation5 + $0x38] sm:$0xf]
    %v67 = vld [vmem:[#allocation5 + $0x3c] sm:$0xff]
    %v68 = vld [vmem:[#allocation5 + $0x44] sm:$0xf]
    %v69 = vld [vmem:[#allocation5 + $0x48] sm:$0xff]
    %v70 = vld [vmem:[#allocation5 + $0x50] sm:$0xf]
    %v71 = vld [vmem:[#allocation5 + $0x54] sm:$0xff]
    %v72 = vld [vmem:[#allocation5 + $0x5c] sm:$0xf]
    %v73 = vld [vmem:[#allocation5 + $0x60] sm:$0xff]
    %v74 = vld [vmem:[#allocation5 + $0x68] sm:$0xf]
    %v75 = vld [vmem:[#allocation5 + $0x6c] sm:$0xff]
    %v76 = vld [vmem:[#allocation5 + $0x74] sm:$0xf]
    %v77 = vld [vmem:[#allocation5 + $0x78] sm:$0xff]
    %v78 = vld [vmem:[#allocation5 + $0x80] sm:$0xf]
    %v79 = vld [vmem:[#allocation5 + $0x84] sm:$0xff]
    %v80 = vld [vmem:[#allocation5 + $0x8c] sm:$0xf]
    %v81 = vld [vmem:[#allocation5 + $0x90] sm:$0xff]
    %v82 = vld [vmem:[#allocation5 + $0x98] sm:$0xf]
    %v83 = vld [vmem:[#allocation5 + $0x9c] sm:$0xff]
    %v84 = vld [vmem:[#allocation5 + $0xa4] sm:$0xf]
    %v85 = vld [vmem:[#allocation5 + $0xa8] sm:$0xff]
    %v86 = vld [vmem:[#allocation5 + $0xb0] sm:$0xf]
    %v87 = vld [vmem:[#allocation5 + $0xb4] sm:$0xff]
    %v88 = vld [vmem:[#allocation5 + $0xbc] sm:$0xf]
    %v91 = vunpack.c.l.b16 %v55
    %v92 = vunpack.c.l.b16 %v56
    %v93 = vpack.c.b16 %v92, %v91
    %v127 = vunpack.c.l.b16 %v57
    %v128 = vunpack.c.h.b16 %v57
    %v129 = vunpack.c.l.b16 %v58
    %v130 = vunpack.c.l.b16 %v59
    %v131 = vunpack.c.h.b16 %v59
    %v132 = vunpack.c.l.b16 %v60
    %v133 = vunpack.c.l.b16 %v61
    %v134 = vunpack.c.h.b16 %v61
    %v135 = vunpack.c.l.b16 %v62
    %v136 = vunpack.c.l.b16 %v63
    %v137 = vunpack.c.h.b16 %v63
    %v138 = vunpack.c.l.b16 %v64
    %v139 = vunpack.c.l.b16 %v65
    %v140 = vunpack.c.h.b16 %v65
    %v141 = vunpack.c.l.b16 %v66
    %v142 = vunpack.c.l.b16 %v67
    %v143 = vunpack.c.h.b16 %v67
    %v144 = vunpack.c.l.b16 %v68
    %v145 = vunpack.c.l.b16 %v69
    %v146 = vunpack.c.h.b16 %v69
    %v147 = vunpack.c.l.b16 %v70
    %v148 = vunpack.c.l.b16 %v71
    %v149 = vunpack.c.h.b16 %v71
    %v150 = vunpack.c.l.b16 %v72
    %v151 = vunpack.c.l.b16 %v73
    %v152 = vunpack.c.h.b16 %v73
    %v153 = vunpack.c.l.b16 %v74
    %v154 = vunpack.c.l.b16 %v75
    %v155 = vunpack.c.h.b16 %v75
    %v156 = vunpack.c.l.b16 %v76
    %v157 = vunpack.c.l.b16 %v77
    %v158 = vunpack.c.h.b16 %v77
    %v159 = vunpack.c.l.b16 %v78
    %v160 = vunpack.c.l.b16 %v79
    %v161 = vunpack.c.h.b16 %v79
    %v162 = vunpack.c.l.b16 %v80
    %v163 = vunpack.c.l.b16 %v81
    %v164 = vunpack.c.h.b16 %v81
    %v165 = vunpack.c.l.b16 %v82
    %v166 = vunpack.c.l.b16 %v83
    %v167 = vunpack.c.h.b16 %v83
    %v168 = vunpack.c.l.b16 %v84
    %v169 = vunpack.c.l.b16 %v85
    %v170 = vunpack.c.h.b16 %v85
    %v171 = vunpack.c.l.b16 %v86
    %v172 = vunpack.c.l.b16 %v87
    %v173 = vunpack.c.h.b16 %v87
    %v174 = vunpack.c.l.b16 %v88
    %v175 = vpack.c.b16 %v130, %v127
    %v176 = vpack.c.b16 %v131, %v128
    %v177 = vpack.c.b16 %v132, %v129
    %v178 = vpack.c.b16 %v136, %v133
    %v179 = vpack.c.b16 %v137, %v134
    %v180 = vpack.c.b16 %v138, %v135
    %v181 = vpack.c.b16 %v142, %v139
    %v182 = vpack.c.b16 %v143, %v140
    %v183 = vpack.c.b16 %v144, %v141
    %v184 = vpack.c.b16 %v148, %v145
    %v185 = vpack.c.b16 %v149, %v146
    %v186 = vpack.c.b16 %v150, %v147
    %v187 = vpack.c.b16 %v154, %v151
    %v188 = vpack.c.b16 %v155, %v152
    %v189 = vpack.c.b16 %v156, %v153
    %v190 = vpack.c.b16 %v160, %v157
    %v191 = vpack.c.b16 %v161, %v158
    %v192 = vpack.c.b16 %v162, %v159
    %v193 = vpack.c.b16 %v166, %v163
    %v194 = vpack.c.b16 %v167, %v164
    %v195 = vpack.c.b16 %v168, %v165
    %v196 = vpack.c.b16 %v172, %v169
    %v197 = vpack.c.b16 %v173, %v170
    %v198 = vpack.c.b16 %v174, %v171
    %223 = vmatprep.subr.bf16.mxu0 %v176
    %224 = vmatpush1.bf16.msra.mxu0 %v175
    %225 = vmatprep.subr.bf16.mxu0 %v179
    %226 = vmatpush1.bf16.msra.mxu0 %v178
    %227 = vmatprep.subr.bf16.mxu0 %v182
    %228 = vmatpush1.bf16.msra.mxu0 %v181
    %229 = vmatprep.subr.bf16.mxu0 %v185
    %230 = vmatpush1.bf16.msra.mxu0 %v184
    %231 = vmatprep.subr.bf16.mxu0 %v188
    %232 = vmatpush1.bf16.msra.mxu0 %v187
    %233 = vmatprep.subr.bf16.mxu0 %v191
    %234 = vmatpush1.bf16.msra.mxu0 %v190
    %235 = vmatprep.subr.bf16.mxu0 %v194
    %236 = vmatpush1.bf16.msra.mxu0 %v193
    %237 = vmatprep.subr.bf16.mxu0 %v197
    %238 = vmatpush1.bf16.msra.mxu0 %v196
    %239 = vmatprep.subr.bf16.mxu0 0
    %240 = vmatpush1.bf16.msra.mxu0 0
    %241 = vmatprep.subr.bf16.mxu0 0
    %242 = vmatpush1.bf16.msra.mxu0 0
    %243 = vmatprep.subr.bf16.mxu0 0
    %244 = vmatpush1.bf16.msra.mxu0 0
    %245 = vmatprep.subr.bf16.mxu0 0
    %246 = vmatpush1.bf16.msra.mxu0 0
    %247 = vmatprep.subr.bf16.mxu0 0
    %248 = vmatpush1.bf16.msra.mxu0 0
    %249 = vmatprep.subr.bf16.mxu0 0
    %250 = vmatpush1.bf16.msra.mxu0 0
    %251 = vmatprep.subr.bf16.mxu0 0
    %252 = vmatpush1.bf16.msra.mxu0 0
    %253 = vmatprep.subr.bf16.mxu0 0
    %254 = vmatpush1.bf16.msra.mxu0 0
    %255 = vmatprep.mubr.bf16.mxu0 0
    %256 = vmatmul.mubr.bf16.gmra.mrb[0].mxu0 %v93
    %v257 = vpop.f32.mrb[0].mxu0
    %v258 = vadd.f32 0.0, %v257
    %v259 = vpop.f32.mrb[0].mxu0
    %v260 = vadd.f32 0.0, %v259
    %v261 = vpop.f32.mrb[0].mxu0
    %v262 = vadd.f32 0.0, %v261
    %v263 = vpop.f32.mrb[0].mxu0
    %v264 = vadd.f32 0.0, %v263
    %265 = vdwg.mxu0
    %266 = vmatprep.subr.bf16.mxu0 0
    %267 = vmatpush1.bf16.msra.mxu0 %v177
    %268 = vmatprep.subr.bf16.mxu0 0
    %269 = vmatpush1.bf16.msra.mxu0 %v180
    %270 = vmatprep.subr.bf16.mxu0 0
    %271 = vmatpush1.bf16.msra.mxu0 %v183
    %272 = vmatprep.subr.bf16.mxu0 0
    %273 = vmatpush1.bf16.msra.mxu0 %v186
    %274 = vmatprep.subr.bf16.mxu0 0
    %275 = vmatpush1.bf16.msra.mxu0 %v189
    %276 = vmatprep.subr.bf16.mxu0 0
    %277 = vmatpush1.bf16.msra.mxu0 %v192
    %278 = vmatprep.subr.bf16.mxu0 0
    %279 = vmatpush1.bf16.msra.mxu0 %v195
    %280 = vmatprep.subr.bf16.mxu0 0
    %281 = vmatpush1.bf16.msra.mxu0 %v198
    %282 = vmatprep.subr.bf16.mxu0 0
    %283 = vmatpush1.bf16.msra.mxu0 0
    %284 = vmatprep.subr.bf16.mxu0 0
    %285 = vmatpush1.bf16.msra.mxu0 0
    %286 = vmatprep.subr.bf16.mxu0 0
    %287 = vmatpush1.bf16.msra.mxu0 0
    %288 = vmatprep.subr.bf16.mxu0 0
    %289 = vmatpush1.bf16.msra.mxu0 0
    %290 = vmatprep.subr.bf16.mxu0 0
    %291 = vmatpush1.bf16.msra.mxu0 0
    %292 = vmatprep.subr.bf16.mxu0 0
    %293 = vmatpush1.bf16.msra.mxu0 0
    %294 = vmatprep.subr.bf16.mxu0 0
    %295 = vmatpush1.bf16.msra.mxu0 0
    %296 = vmatprep.subr.bf16.mxu0 0
    %297 = vmatpush1.bf16.msra.mxu0 0
    %298 = vmatprep.mubr.bf16.mxu0 0
    %299 = vmatmul.mubr.bf16.gmra.mrb[0].mxu0 %v93
    %v300 = vpop.f32.mrb[0].mxu0
    %v301 = vadd.f32 0.0, %v300
    %v302 = vpop.f32.mrb[0].mxu0
    %v303 = vpop.f32.mrb[0].mxu0
    %v304 = vadd.f32 0.0, %v303
    %v305 = vpop.f32.mrb[0].mxu0
    %306 = vdwg.mxu0
    %v307 = vld [vmem:[#allocation7] sm:$0xf]
    %v308 = vlaneseq
    %v309 = vshrl.u32 %v308, 7
    %v310 = vsub.s32 0, %v309
    %v311 = vrot.slane %v307, %v310
    %v312 = vadd.f32 %v258, %v311
    %v313 = vadd.f32 %v262, %v311
    %v314 = vxor.u32 %v312, 2147483648
    %v315 = vxor.u32 %v313, 2147483648
    %v316 = vmul.f32 %v314, 1.442695
    %v317 = vpow.pop %v316
    %v318 = vmul.f32 %v315, 1.442695
    %v319 = vpow.pop %v318
    %v320 = vadd.f32 %v317, 1.0
    %v321 = vadd.f32 %v319, 1.0
    %v322 = vrcp.pop %v320
    %v323 = vmul.f32 1.0, %v322
    %v324 = vrcp.pop %v321
    %v325 = vmul.f32 1.0, %v324
    %v326 = vlaneseq
    %v327 = vshrl.u32 %v326, 7
    %v328 = vsub.s32 1, %v327
    %v329 = vrot.slane %v307, %v328
    %v330 = vadd.f32 %v260, %v329
    %v331 = vadd.f32 %v264, %v329
    %v332 = vxor.u32 %v330, 2147483648
    %v333 = vxor.u32 %v331, 2147483648
    %v334 = vmul.f32 %v332, 1.442695
    %v335 = vpow.pop %v334
    %v336 = vmul.f32 %v333, 1.442695
    %v337 = vpow.pop %v336
    %v338 = vadd.f32 %v335, 1.0
    %v339 = vadd.f32 %v337, 1.0
    %v340 = vrcp.pop %v338
    %v341 = vmul.f32 1.0, %v340
    %v342 = vrcp.pop %v339
    %v343 = vmul.f32 1.0, %v342
    %v344 = vlaneseq
    %v345 = vshrl.u32 %v344, 7
    %v346 = vsub.s32 2, %v345
    %v347 = vrot.slane %v307, %v346
    %v348 = vadd.f32 %v301, %v347
    %v349 = vadd.f32 %v304, %v347
    %v350 = vlaneseq
    %v351 = vshrl.u32 %v350, 7
    %v352 = vsub.s32 3, %v351
    %v353 = vrot.slane %v307, %v352
    %v354 = vmul.f32 %v323, %v353
    %v355 = vmul.f32 %v325, %v353
    %v356 = vadd.f32 %v348, %v354
    %v357 = vadd.f32 %v349, %v355
    %v358 = vtanh.pop %v356
    %v359 = vtanh.pop %v357
    %v360 = vmul.f32 %v341, %v358
    %v361 = vmul.f32 %v343, %v359
    %v362 = vsub.f32 %v358, %v360
    %v363 = vsub.f32 %v359, %v361
    %364 = vst [vmem:[#allocation8] sm:$0xff] %v362
    %365 = vst [vmem:[#allocation8 + $0x8] sm:$0xff] %v363
    // Predicated region
    $region26: #{tpu_custom_call.1} parent=1 // pred_check
      _
    $region27: #{tpu_custom_call.1} parent=1 // pred_check_branch
      %367 = sbr.rel (0) target = $region29
    $region28: #{tpu_custom_call.1} parent=1 // pred_region
      %s369 = ssub.s32 256, 256
      %370 = vsyncadd [#allocation4], %s369
      %s371 = sshll.u32 [#allocation8], 4
      %s372 = int_to_ptr.vmem [resolvable:$true] %s371
      %377 = dma.vmem_to_hbm [thread:$0]  %s372, 256, %s3, [#allocation4], 128, 128, 8
    $region29: #{tpu_custom_call.1} parent=1 // pred_fallthru
      _
    // Predicated region
    $region30: #{tpu_custom_call.1} parent=1 // pred_check
      _
    $region31: #{tpu_custom_call.1} parent=1 // pred_check_branch
      %379 = sbr.rel (0) target = $region33
    $region32: #{tpu_custom_call.1} parent=1 // pred_region
      %380 = dma.done [#allocation4], 256
    $region33: #{tpu_custom_call.1} parent=1 // pred_fallthru
      _
    %381 = vsyncpa [#allocation3], 1
    %382 = vsyncpa [#allocation6], 1
    %383 = vsyncpa [#allocation4], 1

</llo_original>
